<compile_context>
chip_gen: v6e
topology: v6e:2x2x1
jax: 0.10.0
libtpu: 0.0.40
codegen_flags: <defaults>
</compile_context>

<pallas_src>
import functools

import jax
import jax.numpy as jnp
from jax import lax
from jax.experimental import pallas as pl
from jax.experimental.pallas import tpu as pltpu


def _round_up(a, b):
    return (a + b - 1) // b * b


# --------------------------------------------------------------------------
# sum / mean kernel: lane-dense one-hot matmul, f32 VMEM accumulator
# --------------------------------------------------------------------------
def _sum_kernel(seg_ref, x_ref, o_ref, acc_ref, *, num_graphs, g_pad):
    n = pl.program_id(1)

    @pl.when(n == 0)
    def _init():
        acc_ref[...] = jnp.zeros_like(acc_ref)

    seg = seg_ref[0]                                          # (1, tile_n) lane-dense ids
    gids = lax.broadcasted_iota(jnp.int32, (g_pad, 1), 0)     # (g_pad, 1)
    one_hot = (seg == gids).astype(x_ref.dtype)               # (g_pad, tile_n), native dtype
    acc_ref[...] += jnp.dot(one_hot, x_ref[...],
                            preferred_element_type=jnp.float32)

    @pl.when(n == pl.num_programs(1) - 1)
    def _finalize():
        o_ref[...] = acc_ref[0:num_graphs, :].astype(o_ref.dtype)


# --------------------------------------------------------------------------
# max kernel: loop only over graphs present in the tile (scalar-prefetched),
# mask rows via row-iota vs. contiguous per-graph offsets.
# --------------------------------------------------------------------------
def _max_kernel(g_lo_ref, g_cnt_ref, off_ref, x_ref, o_ref, acc_ref,
                *, num_graphs, tile_n):
    n = pl.program_id(1)

    @pl.when(n == 0)
    def _init():
        acc_ref[...] = jnp.full_like(acc_ref, -jnp.inf)

    x = x_ref[...]                                            # native float dtype
    neg_inf = jnp.asarray(-jnp.inf, dtype=x.dtype)
    # Global row index of each row in this tile (sublane-aligned).
    row_id = lax.broadcasted_iota(jnp.int32, (tile_n, 1), 0) + n * tile_n
    g_lo = g_lo_ref[n]
    g_cnt = g_cnt_ref[n]

    def body(j, carry):
        g = g_lo + j
        lo = off_ref[g]
        hi = off_ref[g + 1]
        mask = (row_id >= lo) & (row_id < hi)                 # (tile_n, 1)
        col = jnp.max(jnp.where(mask, x, neg_inf),
                      axis=0, keepdims=True)                  # (1, tile_d)
        acc_ref[g] = jnp.maximum(acc_ref[g], col.astype(jnp.float32))
        return carry

    lax.fori_loop(0, g_cnt, body, 0)

    @pl.when(n == pl.num_programs(1) - 1)
    def _finalize():
        acc = acc_ref[...][0:num_graphs, 0, :]
        # DGL fills empty-graph readouts with 0 rather than -inf.
        # TODO(synk): this also maps a graph whose features are all -inf to 0.
        o_ref[...] = jnp.where(acc == -jnp.inf, 0.0, acc).astype(o_ref.dtype)


# --------------------------------------------------------------------------
# Wrapper
# --------------------------------------------------------------------------
def basic_readout(x, segment_ids, num_graphs, op="sum", tile_n=2048):
    """Pallas equivalent of BasicReadout(op)(g, x) for a batched DGL graph.

    segment_ids must be the contiguous per-node graph ids produced by dgl.batch.
    """
    if op not in ("sum", "mean", "max"):
        raise ValueError(f"unsupported op: {op}")

    # MXU has no integer path on v7x; VPU max/select also assumes float here.
    if x.dtype not in (jnp.float32, jnp.bfloat16):
        x = x.astype(jnp.float32)

    N, D = x.shape
    itemsize = jnp.dtype(x.dtype).itemsize
    seg_src = segment_ids.astype(jnp.int32)

    # Feature tiling: largest multiple of 128 dividing D (capped at 512); the
    # resulting grid axis is 'parallel' so v7x can use both TensorCores.
    tile_d = D
    if D % 128 == 0:
        for cand in (512, 384, 256, 128):
            if D % cand == 0:
                tile_d = cand
                break
    d_tiles = D // tile_d

    # Node tiling: big streaming blocks (<= ~4 MiB per buffer), multiple of 128.
    cap_rows = max(128, ((4 << 20) // max(1, tile_d * itemsize)) // 128 * 128)
    tile_n = max(128, min(int(tile_n), _round_up(N, 128), cap_rows))
    tile_n = tile_n // 128 * 128

    n_pad = _round_up(N, tile_n)
    seg = seg_src
    if n_pad != N:
        x = jnp.pad(x, ((0, n_pad - N), (0, 0)))
        seg = jnp.pad(seg, (0, n_pad - N), constant_values=-1)   # -1 => no graph
    n_tiles = n_pad // tile_n

    # Explicit scoped-VMEM budget from the actual buffer sum (+ headroom),
    # safe on v5e's 16 MiB default scope and within v7x's 64 MiB VMEM.
    x_blk = tile_n * tile_d * itemsize
    seg_blk = 8 * tile_n * 4
    acc_blk = _round_up(max(num_graphs, 1), 8) * 8 * tile_d * 4
    out_blk = _round_up(max(num_graphs, 1), 8) * tile_d * itemsize
    need = 2 * x_blk + 2 * seg_blk + acc_blk + 2 * out_blk
    vmem_limit = int(min(max(need + (8 << 20), 16 << 20), 40 << 20))

    compiler_params = pltpu.CompilerParams(
        dimension_semantics=("parallel", "arbitrary"),
        vmem_limit_bytes=vmem_limit)

    if op in ("sum", "mean"):
        # Sublane-aligned graph padding for the one-hot MXU LHS / accumulator.
        sub = 8 if itemsize >= 4 else (16 if itemsize == 2 else 32)
        g_pad = _round_up(max(num_graphs, 1), sub)
        seg3 = seg.reshape(n_tiles, 1, tile_n)                   # lane-dense ids

        kernel = functools.partial(_sum_kernel, num_graphs=num_graphs, g_pad=g_pad)
        out = pl.pallas_call(
            kernel,
            out_shape=jax.ShapeDtypeStruct((num_graphs, D), x.dtype),
            grid_spec=pltpu.PrefetchScalarGridSpec(
                num_scalar_prefetch=0,
                grid=(d_tiles, n_tiles),
                in_specs=[
                    pl.BlockSpec((1, 1, tile_n), lambda d, n: (n, 0, 0)),
                    pl.BlockSpec((tile_n, tile_d), lambda d, n: (n, d)),
                ],
                out_specs=pl.BlockSpec((num_graphs, tile_d), lambda d, n: (0, d)),
                scratch_shapes=[pltpu.VMEM((g_pad, tile_d), jnp.float32)],
            ),
            compiler_params=compiler_params,
        )(seg3, x)

        if op == "sum":
            return out
        # Mean: counts are known from the batched graph; divide in the wrapper.
        counts = jnp.bincount(seg_src, length=num_graphs).astype(jnp.float32)
        mean = out.astype(jnp.float32) / jnp.maximum(counts, 1.0)[:, None]
        return mean.astype(out.dtype)

    # ---- op == "max" -----------------------------------------------------
    g_pad = _round_up(max(num_graphs, 1), 8)

    # Per-graph contiguous node offsets (dgl.batch layout) and per-tile graph
    # id ranges, prefetched into SMEM.
    counts = jnp.bincount(seg_src, length=num_graphs).astype(jnp.int32)
    offsets = jnp.concatenate(
        [jnp.zeros((1,), jnp.int32), jnp.cumsum(counts).astype(jnp.int32)])

    seg_tiles = seg.reshape(n_tiles, tile_n)
    valid = seg_tiles >= 0
    t_lo = jnp.min(jnp.where(valid, seg_tiles, num_graphs), axis=1)
    t_hi = jnp.max(jnp.where(valid, seg_tiles, -1), axis=1)
    tile_g_cnt = jnp.maximum(t_hi - t_lo + 1, 0).astype(jnp.int32)
    tile_g_lo = jnp.clip(t_lo, 0, max(num_graphs - 1, 0)).astype(jnp.int32)

    kernel = functools.partial(_max_kernel, num_graphs=num_graphs, tile_n=tile_n)
    return pl.pallas_call(
        kernel,
        out_shape=jax.ShapeDtypeStruct((num_graphs, D), x.dtype),
        grid_spec=pltpu.PrefetchScalarGridSpec(
            num_scalar_prefetch=3,
            grid=(d_tiles, n_tiles),
            in_specs=[
                pl.BlockSpec((tile_n, tile_d),
                             lambda d, n, lo, cnt, off: (n, d)),
            ],
            out_specs=pl.BlockSpec((num_graphs, tile_d),
                                   lambda d, n, lo, cnt, off: (0, d)),
            scratch_shapes=[pltpu.VMEM((g_pad, 1, tile_d), jnp.float32)],
        ),
        compiler_params=compiler_params,
    )(tile_g_lo, tile_g_cnt, offsets, x)


# --------------------------------------------------------------------------
# Demo / correctness check
# --------------------------------------------------------------------------
def _check(x, seg_ids, counts_list, num_graphs, tile_n):
    counts = jnp.array(counts_list, dtype=jnp.float32)
    ref_sum = jax.ops.segment_sum(x, seg_ids, num_segments=num_graphs)
    ref_mean = ref_sum / jnp.maximum(counts[:, None], 1.0)
    ref_max = jax.ops.segment_max(x, seg_ids, num_segments=num_graphs)

    out_sum = basic_readout(x, seg_ids, num_graphs, op="sum", tile_n=tile_n)
    out_mean = basic_readout(x, seg_ids, num_graphs, op="mean", tile_n=tile_n)
    out_max = basic_readout(x, seg_ids, num_graphs, op="max", tile_n=tile_n)
    jax.block_until_ready((out_sum, out_mean, out_max))

    assert jnp.allclose(out_sum, ref_sum, atol=1e-4, rtol=1e-4)
    assert jnp.allclose(out_mean, ref_mean, atol=1e-4, rtol=1e-4)
    assert jnp.allclose(out_max, ref_max, atol=1e-4, rtol=1e-4)


if __name__ == "__main__":
    key = jax.random.PRNGKey(0)
    k1, k2 = jax.random.split(key)

    # Batched graph #1: 4 graphs with [16, 24, 8, 16] nodes, D = 128 (lane-dense).
    counts1 = [16, 24, 8, 16]
    n1, g1 = int(sum(counts1)), len(counts1)
    seg1 = jnp.repeat(jnp.arange(g1, dtype=jnp.int32),
                      jnp.array(counts1, jnp.int32), total_repeat_length=n1)
    x1 = jax.random.normal(k1, (n1, 128), dtype=jnp.float32)
    _check(x1, seg1, counts1, g1, tile_n=2048)

    # Batched graph #2: graphs straddling node-tile boundaries (tile_n=128, N=300
    # -> 3 tiles with padding), exercising the multi-tile accumulation paths.
    counts2 = [70, 130, 40, 60]
    n2, g2 = int(sum(counts2)), len(counts2)
    seg2 = jnp.repeat(jnp.arange(g2, dtype=jnp.int32),
                      jnp.array(counts2, jnp.int32), total_repeat_length=n2)
    x2 = jax.random.normal(k2, (n2, 128), dtype=jnp.float32)
    _check(x2, seg2, counts2, g2, tile_n=128)

    print("KERNEL_OK")
</pallas_src>

<mosaic_0001>
module attributes {stable_mosaic.version = 11 : i64} {
  func.func @_sum_kernel(%arg0: i32, %arg1: i32, %arg2: memref<1x1x128xi32, #tpu.memory_space<vmem>>, %arg3: memref<128x128xf32, #tpu.memory_space<vmem>>, %arg4: memref<4x128xf32, #tpu.memory_space<vmem>>, %arg5: memref<8x128xf32, #tpu.memory_space<vmem>>) attributes {dimension_semantics = [#tpu.dimension_semantics<parallel>, #tpu.dimension_semantics<arbitrary>], iteration_bounds = array<i64: 1, 1>, scalar_prefetch = 0 : i64, scratch_operands = 1 : i64, tpu.core_type = #tpu.core_type<tc>, window_params = [{transform_indices = @transform_0, window_bounds = array<i64: 1, 1, 128>}, {transform_indices = @transform_1, window_bounds = array<i64: 128, 128>}, {transform_indices = @transform_2, window_bounds = array<i64: 4, 128>}]} {
    %c0_i32 = arith.constant 0 : i32
    %0 = arith.cmpi eq, %arg1, %c0_i32 : i32
    %1 = arith.extui %0 : i1 to i32
    %c0_i32_0 = arith.constant 0 : i32
    %2 = arith.cmpi ne, %1, %c0_i32_0 : i32
    scf.if %2 {
      %cst_11 = arith.constant 0.000000e+00 : f32
      %19 = vector.broadcast %cst_11 : f32 to vector<8x128xf32>
      %c0_12 = arith.constant 0 : index
      %c0_13 = arith.constant 0 : index
      %20 = vector.load %arg5[%c0_12, %c0_13] : memref<8x128xf32, #tpu.memory_space<vmem>>, vector<8x128xf32>
      tpu.vector_store %arg5[%c0_12, %c0_13], %19 {strides = array<i32>} : memref<8x128xf32, #tpu.memory_space<vmem>>, vector<8x128xf32>,
    } else {
    }
    %c0 = arith.constant 0 : index
    %c0_1 = arith.constant 0 : index
    %c0_2 = arith.constant 0 : index
    %3 = vector.load %arg2[%c0, %c0_1, %c0_2] : memref<1x1x128xi32, #tpu.memory_space<vmem>>, vector<1x1x128xi32>
    %4 = vector.shape_cast %3 : vector<1x1x128xi32> to vector<1x128xi32>
    %5 = tpu.iota {dimensions = array<i32: 0>} : vector<8x1xi32>
    %6 = vector.broadcast %4 : vector<1x128xi32> to vector<8x128xi32>
    %7 = vector.broadcast %5 : vector<8x1xi32> to vector<8x128xi32>
    %8 = arith.cmpi eq, %6, %7 : vector<8x128xi32>
    %9 = arith.extui %8 : vector<8x128xi1> to vector<8x128xi32>
    %10 = arith.sitofp %9 : vector<8x128xi32> to vector<8x128xf32>
    %c0_3 = arith.constant 0 : index
    %c0_4 = arith.constant 0 : index
    %11 = vector.load %arg5[%c0_3, %c0_4] : memref<8x128xf32, #tpu.memory_space<vmem>>, vector<8x128xf32>
    %c0_5 = arith.constant 0 : index
    %c0_6 = arith.constant 0 : index
    %12 = vector.load %arg3[%c0_5, %c0_6] : memref<128x128xf32, #tpu.memory_space<vmem>>, vector<128x128xf32>
    %cst = arith.constant dense<0.000000e+00> : vector<8x128xf32>
    %13 = tpu.matmul %10, %12, %cst {dimension_numbers = #tpu.dot_dimension_numbers<[1], [0], [0], [1], [0, 0, 1, 1], [], []>} : vector<8x128xf32>, vector<128x128xf32>, vector<8x128xf32> -> vector<8x128xf32>
    %14 = arith.addf %11, %13 : vector<8x128xf32>
    %c0_7 = arith.constant 0 : index
    %c0_8 = arith.constant 0 : index
    %15 = vector.load %arg5[%c0_7, %c0_8] : memref<8x128xf32, #tpu.memory_space<vmem>>, vector<8x128xf32>
    tpu.vector_store %arg5[%c0_7, %c0_8], %14 {strides = array<i32>} : memref<8x128xf32, #tpu.memory_space<vmem>>, vector<8x128xf32>,
    %c0_i32_9 = arith.constant 0 : i32
    %16 = arith.cmpi eq, %arg1, %c0_i32_9 : i32
    %17 = arith.extui %16 : i1 to i32
    %c0_i32_10 = arith.constant 0 : i32
    %18 = arith.cmpi ne, %17, %c0_i32_10 : i32
    scf.if %18 {
      %c0_11 = arith.constant 0 : index
      %c0_12 = arith.constant 0 : index
      %19 = vector.load %arg5[%c0_11, %c0_12] : memref<8x128xf32, #tpu.memory_space<vmem>>, vector<4x128xf32>
      %c0_13 = arith.constant 0 : index
      %c0_14 = arith.constant 0 : index
      %20 = vector.load %arg4[%c0_13, %c0_14] : memref<4x128xf32, #tpu.memory_space<vmem>>, vector<4x128xf32>
      tpu.vector_store %arg4[%c0_13, %c0_14], %19 {strides = array<i32>} : memref<4x128xf32, #tpu.memory_space<vmem>>, vector<4x128xf32>,
    } else {
    }
    return
  }
  func.func @transform_0(%arg0: i32, %arg1: i32) -> (i32, i32, i32) {
    %c0_i32 = arith.constant 0 : i32
    %c0_i32_0 = arith.constant 0 : i32
    %c0_i32_1 = arith.constant 0 : i32
    return %arg1, %c0_i32, %c0_i32_0 : i32, i32, i32
  }
  func.func @transform_1(%arg0: i32, %arg1: i32) -> (i32, i32) {
    %c0_i32 = arith.constant 0 : i32
    return %arg1, %arg0 : i32, i32
  }
  func.func @transform_2(%arg0: i32, %arg1: i32) -> (i32, i32) {
    %c0_i32 = arith.constant 0 : i32
    %c0_i32_0 = arith.constant 0 : i32
    return %c0_i32, %arg0 : i32, i32
  }
}

</mosaic_0001>

<llo_original>
// kernel: tpu_custom_call.1
$region0: #{tpu_custom_call.1}
  #allocation0 [shape = 'u32[]', space=smem, size = 0x4, offset = 0x4, fixed_abs, tag = 'smem constant byte address 0x4 - core index']
  #allocation1 [shape = 'u32[144,128]{1,0:T(1,128)}', space=vmem, size = 0x12000, scoped, tag = 'internal scratch']
  #allocation2 [shape = 'f32[8,128]{1,0:T(8,128)}', space=vmem, size = 0x1000, scoped, tag = 'scratch operand']
  %s0 = inlined_call_operand.hbm [shape: s32[1,1,128], index: 0, kind: input, shape index: {}]
  %s1 = inlined_call_operand.hbm [shape: f32[128,128], index: 1, kind: input, shape index: {}]
  %s2 = inlined_call_operand.hbm [shape: f32[4,128], index: 2, kind: output, shape index: {}]
  %s3 = sld [smem:[#allocation0]]
  $region34: #{tpu_custom_call.1} parent=0
    _
  %s5 = ssub.s32 1, %s3
  %s6 = scalar_select 0, %s5, %s3
  $region1: #{tpu_custom_call.1} parent=0
    #allocation3 [shape = 'u8[512]{0}', space=vmem, size = 0x400, scoped, tag = 'input window, operand 0, single buffered']
    #allocation4 [shape = 's32[1]{0}', space=sflag, size = 0x4, scoped, tag = 'scoped memory for tpu_custom_call.1']
    #allocation5 [shape = 's32[1]{0}', space=sflag, size = 0x4, scoped, tag = 'scoped memory for tpu_custom_call.1']
    #allocation6 [shape = 'u8[65536]{0}', space=vmem, size = 0x10000, scoped, tag = 'input window, operand 1, single buffered']
    #allocation7 [shape = 's32[1]{0}', space=sflag, size = 0x4, scoped, tag = 'scoped memory for tpu_custom_call.1']
    #allocation8 [shape = 'u8[2048]{0}', space=vmem, size = 0x800, scoped, tag = 'output window, operand 0, single buffered']
    %7 = vsyncpa [#allocation4], 0
    %8 = vsyncpa [#allocation7], 0
    %9 = vsyncpa [#allocation5], 0
    // Predicated region
    $region2: #{tpu_custom_call.1} parent=1 // pred_check
      _
    $region3: #{tpu_custom_call.1} parent=1 // pred_check_branch
      %11 = sbr.rel (0) target = $region5
    $region4: #{tpu_custom_call.1} parent=1 // pred_region
      %s13 = ssub.s32 16, 16
      %14 = vsyncadd [#allocation4], %s13
      %s16 = sshll.u32 [#allocation3], 4
      %s17 = int_to_ptr.vmem [resolvable:$true] %s16
      %19 = dma.hbm_to_vmem [thread:$0]  %s0, 16, %s17, [#allocation4]
    $region5: #{tpu_custom_call.1} parent=1 // pred_fallthru
      _
    // Predicated region
    $region6: #{tpu_custom_call.1} parent=1 // pred_check
      _
    $region7: #{tpu_custom_call.1} parent=1 // pred_check_branch
      %21 = sbr.rel (0) target = $region9
    $region8: #{tpu_custom_call.1} parent=1 // pred_region
      %s23 = ssub.s32 2048, 2048
      %24 = vsyncadd [#allocation7], %s23
      %s25 = sshll.u32 [#allocation6], 4
      %s26 = int_to_ptr.vmem [resolvable:$true] %s25
      %31 = dma.hbm_to_vmem [thread:$0]  %s1, 2048, %s26, [#allocation7], 128, 128, 8
    $region9: #{tpu_custom_call.1} parent=1 // pred_fallthru
      _
    // Predicated region
    $region10: #{tpu_custom_call.1} parent=1 // pred_check
      _
    $region11: #{tpu_custom_call.1} parent=1 // pred_check_branch
      %33 = sbr.rel (0) target = $region13
    $region12: #{tpu_custom_call.1} parent=1 // pred_region
      %34 = dma.done [#allocation4], 16
    $region13: #{tpu_custom_call.1} parent=1 // pred_fallthru
      _
    // Predicated region
    $region14: #{tpu_custom_call.1} parent=1 // pred_check
      _
    $region15: #{tpu_custom_call.1} parent=1 // pred_check_branch
      %36 = sbr.rel (0) target = $region17
    $region16: #{tpu_custom_call.1} parent=1 // pred_region
      %37 = dma.done [#allocation7], 2048
    $region17: #{tpu_custom_call.1} parent=1 // pred_fallthru
      _
    %p38 = scmp.eq.s32.totalorder 0, 0
    // Predicated region
    $region18: #{tpu_custom_call.1} parent=1 // pred_check
      %p39 = pneg %p38
    $region19: #{tpu_custom_call.1} parent=1 // pred_check_branch
      %41 = sbr.rel (%p39) target = $region21
    $region20: #{tpu_custom_call.1} parent=1 // pred_region
      %42 = vst [vmem:[#allocation2] sm:$0xff] 0.0
    $region21: #{tpu_custom_call.1} parent=1 // pred_fallthru
      _
    %v43 = vld [vmem:[#allocation3] sm:$0x1]
    %v44 = vlaneseq
    %v45 = vshrl.u32 %v44, 7
    %v46 = vlaneseq
    %v47 = vshrl.u32 %v46, 7
    %v48 = vsub.s32 0, %v47
    %v49 = vrot.slane %v43, %v48
    %vm50 = vcmp.eq.s32.totalorder %v49, %v45
    %v51 = vsel %vm50, 1, 0
    %v52 = vcvt.s32.f32 %v51
    %v53 = vld [vmem:[#allocation2] sm:$0xff]
    %v54 = vld [vmem:[#allocation6] sm:$0xff]
    %v55 = vld [vmem:[#allocation6 + $0x8] sm:$0xff]
    %v56 = vld [vmem:[#allocation6 + $0x10] sm:$0xff]
    %v57 = vld [vmem:[#allocation6 + $0x18] sm:$0xff]
    %v58 = vld [vmem:[#allocation6 + $0x20] sm:$0xff]
    %v59 = vld [vmem:[#allocation6 + $0x28] sm:$0xff]
    %v60 = vld [vmem:[#allocation6 + $0x30] sm:$0xff]
    %v61 = vld [vmem:[#allocation6 + $0x38] sm:$0xff]
    %v62 = vld [vmem:[#allocation6 + $0x40] sm:$0xff]
    %v63 = vld [vmem:[#allocation6 + $0x48] sm:$0xff]
    %v64 = vld [vmem:[#allocation6 + $0x50] sm:$0xff]
    %v65 = vld [vmem:[#allocation6 + $0x58] sm:$0xff]
    %v66 = vld [vmem:[#allocation6 + $0x60] sm:$0xff]
    %v67 = vld [vmem:[#allocation6 + $0x68] sm:$0xff]
    %v68 = vld [vmem:[#allocation6 + $0x70] sm:$0xff]
    %v69 = vld [vmem:[#allocation6 + $0x78] sm:$0xff]
    %70 = vmatprep.subr.mxu0 0.0
    %71 = vmatpush1.msra.mxu0 %v69
    %72 = vmatprep.subr.mxu0 0.0
    %73 = vmatpush1.msra.mxu0 %v68
    %74 = vmatprep.subr.mxu0 0.0
    %75 = vmatpush1.msra.mxu0 %v67
    %76 = vmatprep.subr.mxu0 0.0
    %77 = vmatpush1.msra.mxu0 %v66
    %78 = vmatprep.subr.mxu0 0.0
    %79 = vmatpush1.msra.mxu0 %v65
    %80 = vmatprep.subr.mxu0 0.0
    %81 = vmatpush1.msra.mxu0 %v64
    %82 = vmatprep.subr.mxu0 0.0
    %83 = vmatpush1.msra.mxu0 %v63
    %84 = vmatprep.subr.mxu0 0.0
    %85 = vmatpush1.msra.mxu0 %v62
    %86 = vmatprep.subr.mxu0 0.0
    %87 = vmatpush1.msra.mxu0 %v61
    %88 = vmatprep.subr.mxu0 0.0
    %89 = vmatpush1.msra.mxu0 %v60
    %90 = vmatprep.subr.mxu0 0.0
    %91 = vmatpush1.msra.mxu0 %v59
    %92 = vmatprep.subr.mxu0 0.0
    %93 = vmatpush1.msra.mxu0 %v58
    %94 = vmatprep.subr.mxu0 0.0
    %95 = vmatpush1.msra.mxu0 %v57
    %96 = vmatprep.subr.mxu0 0.0
    %97 = vmatpush1.msra.mxu0 %v56
    %98 = vmatprep.subr.mxu0 0.0
    %99 = vmatpush1.msra.mxu0 %v55
    %100 = vmatprep.subr.mxu0 0.0
    %101 = vmatpush1.msra.mxu0 %v54
    %102 = vmatprep.subr.mxu0 0.0
    %103 = vmatpush2.msra.mxu0 0.0
    %104 = vmatprep.subr.mxu0 0.0
    %105 = vmatpush2.msra.mxu0 0.0
    %106 = vmatprep.subr.mxu0 0.0
    %107 = vmatpush2.msra.mxu0 0.0
    %108 = vmatprep.subr.mxu0 0.0
    %109 = vmatpush2.msra.mxu0 0.0
    %110 = vmatprep.subr.mxu0 0.0
    %111 = vmatpush2.msra.mxu0 0.0
    %112 = vmatprep.subr.mxu0 0.0
    %113 = vmatpush2.msra.mxu0 0.0
    %114 = vmatprep.subr.mxu0 0.0
    %115 = vmatpush2.msra.mxu0 0.0
    %116 = vmatprep.subr.mxu0 0.0
    %117 = vmatpush2.msra.mxu0 0.0
    %118 = vmatprep.subr.mxu0 0.0
    %119 = vmatpush2.msra.mxu0 0.0
    %120 = vmatprep.subr.mxu0 0.0
    %121 = vmatpush2.msra.mxu0 0.0
    %122 = vmatprep.subr.mxu0 0.0
    %123 = vmatpush2.msra.mxu0 0.0
    %124 = vmatprep.subr.mxu0 0.0
    %125 = vmatpush2.msra.mxu0 0.0
    %126 = vmatprep.subr.mxu0 0.0
    %127 = vmatpush2.msra.mxu0 0.0
    %128 = vmatprep.subr.mxu0 0.0
    %129 = vmatpush2.msra.mxu0 0.0
    %130 = vmatprep.subr.mxu0 0.0
    %131 = vmatpush2.msra.mxu0 0.0
    %132 = vmatprep.subr.mxu0 0.0
    %133 = vmatpush2.msra.mxu0 0.0
    %134 = vmatprep.mubr.f32.mxu0 0.0
    %135 = vmatmul.mubr.f32.gmra.mxu0 %v52
    %v136 = vpop.f32.mrf.mxu0
    %v137 = vadd.f32 0.0, %v136
    %v138 = vpop.f32.mrf.mxu0
    %139 = vdwg.mxu0
    %v140 = vadd.f32 %v53, %v137
    %141 = vst [vmem:[#allocation2] sm:$0xff] %v140
    // Predicated region
    $region22: #{tpu_custom_call.1} parent=1 // pred_check
      %p142 = pneg %p38
    $region23: #{tpu_custom_call.1} parent=1 // pred_check_branch
      %144 = sbr.rel (%p142) target = $region25
    $region24: #{tpu_custom_call.1} parent=1 // pred_region
      %v145 = vld [vmem:[#allocation2] sm:$0xf]
      %146 = vst [vmem:[#allocation8] sm:$0xf] %v145
    $region25: #{tpu_custom_call.1} parent=1 // pred_fallthru
      _
    // Predicated region
    $region26: #{tpu_custom_call.1} parent=1 // pred_check
      _
    $region27: #{tpu_custom_call.1} parent=1 // pred_check_branch
      %148 = sbr.rel (0) target = $region29
    $region28: #{tpu_custom_call.1} parent=1 // pred_region
      %s150 = ssub.s32 64, 64
      %151 = vsyncadd [#allocation5], %s150
      %s153 = sshll.u32 [#allocation8], 4
      %s154 = int_to_ptr.vmem [resolvable:$true] %s153
      %156 = dma.vmem_to_hbm [thread:$0]  %s154, 64, %s2, [#allocation5]
    $region29: #{tpu_custom_call.1} parent=1 // pred_fallthru
      _
    // Predicated region
    $region30: #{tpu_custom_call.1} parent=1 // pred_check
      _
    $region31: #{tpu_custom_call.1} parent=1 // pred_check_branch
      %158 = sbr.rel (0) target = $region33
    $region32: #{tpu_custom_call.1} parent=1 // pred_region
      %159 = dma.done [#allocation5], 64
    $region33: #{tpu_custom_call.1} parent=1 // pred_fallthru
      _
    %160 = vsyncpa [#allocation4], 1
    %161 = vsyncpa [#allocation7], 1
    %162 = vsyncpa [#allocation5], 1

</llo_original>
